<compile_context>
chip_gen: v7x
topology: tpu7x:2x2x1
jax: 0.10.0
libtpu: 0.0.40
codegen_flags: <defaults>
</compile_context>

<pallas_src>
import math

import jax
import jax.numpy as jnp
from jax.experimental import pallas as pl
from jax.experimental.pallas import tpu as pltpu


def _round_up(x, m):
    return ((x + m - 1) // m) * m


def _motion_loss_kernel(pred_ref, gt_ref, partial_ref, acc_ref):
    # Grid: (split i  -> "parallel", reduction step k -> "arbitrary")
    k = pl.program_id(1)

    @pl.when(k == 0)
    def _():
        acc_ref[...] = jnp.zeros_like(acc_ref)

    # Hot path: diff -> square -> lane reduce (keepdims) -> sqrt -> vector acc.
    diff = pred_ref[...].astype(jnp.float32) - gt_ref[...].astype(jnp.float32)
    sq = jnp.sum(diff * diff, axis=-1, keepdims=True)      # (TR, 1)
    acc_ref[...] = acc_ref[...] + jnp.sqrt(sq)              # per-row L2 norms

    # Epilogue for this split: collapse the row accumulator to one partial sum.
    @pl.when(k == pl.num_programs(1) - 1)
    def _():
        partial_ref[...] = jnp.sum(acc_ref[...]).reshape(1, 1, 1)


def motion_loss(pred, gt, *, tile_rows=None, num_splits=2):
    """mean over all leading axes of the L2 norm over the last axis of (pred-gt)."""
    assert pred.shape == gt.shape
    D = pred.shape[-1]
    R = int(math.prod(pred.shape[:-1])) if pred.ndim > 1 else 1
    pred2 = pred.reshape(R, D)
    gt2 = gt.reshape(R, D)

    # ---- tile sizing: large HBM-friendly tiles within the v5e VMEM budget ----
    if tile_rows is None:
        lane_d = max(_round_up(D, 128), 128)          # lanes pad to 128 in VMEM
        budget = 8 * 1024 * 1024                      # 2 inputs x 2 buffers
        per_row_bytes = 4 * lane_d * 4                # 2in x 2buf x lanes x 4B
        tile_rows = max(8, min(2048, (budget // per_row_bytes) // 8 * 8))
    # Do not pad far beyond the actual per-split row count for tiny inputs.
    rows_per_split = -(-R // num_splits)              # ceil
    tile_rows = max(8, min(tile_rows, _round_up(rows_per_split, 8)))

    # ---- pad rows so every split has a whole number of tiles ----------------
    rows_per_split = _round_up(rows_per_split, tile_rows)
    r_pad = rows_per_split * num_splits
    if r_pad != R:
        pad = r_pad - R
        # identical zero padding on both inputs -> norm contribution is 0
        pred2 = jnp.pad(pred2, ((0, pad), (0, 0)))
        gt2 = jnp.pad(gt2, ((0, pad), (0, 0)))

    steps = rows_per_split // tile_rows
    grid = (num_splits, steps)

    partials = pl.pallas_call(
        _motion_loss_kernel,
        out_shape=jax.ShapeDtypeStruct((num_splits, 1, 1), jnp.float32),
        grid_spec=pltpu.PrefetchScalarGridSpec(
            num_scalar_prefetch=0,
            grid=grid,
            in_specs=[
                pl.BlockSpec((tile_rows, D),
                             lambda i, k, steps=steps: (i * steps + k, 0)),
                pl.BlockSpec((tile_rows, D),
                             lambda i, k, steps=steps: (i * steps + k, 0)),
            ],
            out_specs=pl.BlockSpec((1, 1, 1), lambda i, k: (i, 0, 0)),
            scratch_shapes=[pltpu.VMEM((tile_rows, 1), jnp.float32)],
        ),
        compiler_params=pltpu.CompilerParams(
            # split axis shards across TensorCores (v7x); step axis is a reduction
            dimension_semantics=("parallel", "arbitrary"),
        ),
    )(pred2, gt2)

    # Combine per-split partial sums; multiply by precomputed 1/R (true row count).
    return jnp.sum(partials) * jnp.float32(1.0 / R)


if __name__ == "__main__":
    key = jax.random.PRNGKey(0)
    k1, k2 = jax.random.split(key)

    # Small shapes consistent with the forward: (batch, seq, feat)
    B, S, D = 2, 8, 64
    pred = jax.random.normal(k1, (B, S, D), dtype=jnp.float32)
    gt = jax.random.normal(k2, (B, S, D), dtype=jnp.float32)

    loss = motion_loss(pred, gt)
    jax.block_until_ready(loss)
    ref = jnp.mean(jnp.linalg.norm(pred - gt, axis=-1))
    assert jnp.allclose(loss, ref, rtol=1e-5, atol=1e-5), (loss, ref)

    # Second check: odd row count exercises the padding / multi-tile path.
    k3, k4 = jax.random.split(k2)
    pred_odd = jax.random.normal(k3, (3, 7, 64), dtype=jnp.float32)
    gt_odd = jax.random.normal(k4, (3, 7, 64), dtype=jnp.float32)
    loss_odd = motion_loss(pred_odd, gt_odd)
    jax.block_until_ready(loss_odd)
    ref_odd = jnp.mean(jnp.linalg.norm(pred_odd - gt_odd, axis=-1))
    assert jnp.allclose(loss_odd, ref_odd, rtol=1e-5, atol=1e-5), (loss_odd, ref_odd)

    print("KERNEL_OK")
</pallas_src>

<mosaic_0001>
module attributes {stable_mosaic.version = 11 : i64} {
  func.func @_motion_loss_kernel(%arg0: i32, %arg1: i32, %arg2: memref<8x64xf32, #tpu.memory_space<vmem>>, %arg3: memref<8x64xf32, #tpu.memory_space<vmem>>, %arg4: memref<1x1x1xf32, #tpu.memory_space<vmem>>, %arg5: memref<8x1xf32, #tpu.memory_space<vmem>>) attributes {dimension_semantics = [#tpu.dimension_semantics<parallel>, #tpu.dimension_semantics<arbitrary>], iteration_bounds = array<i64: 2, 1>, scalar_prefetch = 0 : i64, scratch_operands = 1 : i64, tpu.core_type = #tpu.core_type<tc>, window_params = [{transform_indices = @transform_0, window_bounds = array<i64: 8, 64>}, {transform_indices = @transform_1, window_bounds = array<i64: 8, 64>}, {transform_indices = @transform_2, window_bounds = array<i64: 1, 1, 1>}]} {
    %c0_i32 = arith.constant 0 : i32
    %0 = arith.cmpi eq, %arg1, %c0_i32 : i32
    %1 = arith.extui %0 : i1 to i32
    %c0_i32_0 = arith.constant 0 : i32
    %2 = arith.cmpi ne, %1, %c0_i32_0 : i32
    scf.if %2 {
      %cst_10 = arith.constant 0.000000e+00 : f32
      %16 = vector.broadcast %cst_10 : f32 to vector<8x1xf32>
      %c0_11 = arith.constant 0 : index
      %c0_12 = arith.constant 0 : index
      %17 = vector.load %arg5[%c0_11, %c0_12] : memref<8x1xf32, #tpu.memory_space<vmem>>, vector<8x1xf32>
      tpu.vector_store %arg5[%c0_11, %c0_12], %16 {strides = array<i32>} : memref<8x1xf32, #tpu.memory_space<vmem>>, vector<8x1xf32>,
    } else {
    }
    %c0 = arith.constant 0 : index
    %c0_1 = arith.constant 0 : index
    %3 = vector.load %arg2[%c0, %c0_1] : memref<8x64xf32, #tpu.memory_space<vmem>>, vector<8x64xf32>
    %c0_2 = arith.constant 0 : index
    %c0_3 = arith.constant 0 : index
    %4 = vector.load %arg3[%c0_2, %c0_3] : memref<8x64xf32, #tpu.memory_space<vmem>>, vector<8x64xf32>
    %5 = arith.subf %3, %4 : vector<8x64xf32>
    %6 = arith.mulf %5, %5 : vector<8x64xf32>
    %cst = arith.constant dense<0.000000e+00> : vector<8xf32>
    %7 = vector.multi_reduction <add>, %6, %cst [1] : vector<8x64xf32> to vector<8xf32>
    %8 = vector.shape_cast %7 : vector<8xf32> to vector<8x1xf32>
    %c0_4 = arith.constant 0 : index
    %c0_5 = arith.constant 0 : index
    %9 = vector.load %arg5[%c0_4, %c0_5] : memref<8x1xf32, #tpu.memory_space<vmem>>, vector<8x1xf32>
    %10 = math.sqrt %8 : vector<8x1xf32>
    %11 = arith.addf %9, %10 : vector<8x1xf32>
    %c0_6 = arith.constant 0 : index
    %c0_7 = arith.constant 0 : index
    %12 = vector.load %arg5[%c0_6, %c0_7] : memref<8x1xf32, #tpu.memory_space<vmem>>, vector<8x1xf32>
    tpu.vector_store %arg5[%c0_6, %c0_7], %11 {strides = array<i32>} : memref<8x1xf32, #tpu.memory_space<vmem>>, vector<8x1xf32>,
    %c0_i32_8 = arith.constant 0 : i32
    %13 = arith.cmpi eq, %arg1, %c0_i32_8 : i32
    %14 = arith.extui %13 : i1 to i32
    %c0_i32_9 = arith.constant 0 : i32
    %15 = arith.cmpi ne, %14, %c0_i32_9 : i32
    scf.if %15 {
      %c0_10 = arith.constant 0 : index
      %c0_11 = arith.constant 0 : index
      %16 = vector.load %arg5[%c0_10, %c0_11] : memref<8x1xf32, #tpu.memory_space<vmem>>, vector<8x1xf32>
      %17 = vector.shape_cast %16 : vector<8x1xf32> to vector<1x8x1xf32>
      %cst_12 = arith.constant dense<0.000000e+00> : vector<1xf32>
      %18 = vector.multi_reduction <add>, %17, %cst_12 [1, 2] : vector<1x8x1xf32> to vector<1xf32>
      %19 = vector.shape_cast %18 : vector<1xf32> to vector<1x1x1xf32>
      %20 = vector.extract %19[0, 0, 0] : f32 from vector<1x1x1xf32>
      %21 = vector.broadcast %20 : f32 to vector<1x1x1xf32>
      %c0_13 = arith.constant 0 : index
      %c0_14 = arith.constant 0 : index
      %c0_15 = arith.constant 0 : index
      %22 = vector.load %arg4[%c0_13, %c0_14, %c0_15] : memref<1x1x1xf32, #tpu.memory_space<vmem>>, vector<1x1x1xf32>
      tpu.vector_store %arg4[%c0_13, %c0_14, %c0_15], %21 {strides = array<i32>} : memref<1x1x1xf32, #tpu.memory_space<vmem>>, vector<1x1x1xf32>,
    } else {
    }
    return
  }
  func.func @transform_0(%arg0: i32, %arg1: i32) -> (i32, i32) {
    %c1_i32 = arith.constant 1 : i32
    %0 = arith.muli %arg0, %c1_i32 : i32
    %1 = arith.addi %0, %arg1 : i32
    %c0_i32 = arith.constant 0 : i32
    %c0_i32_0 = arith.constant 0 : i32
    return %1, %c0_i32 : i32, i32
  }
  func.func @transform_1(%arg0: i32, %arg1: i32) -> (i32, i32) {
    %c1_i32 = arith.constant 1 : i32
    %0 = arith.muli %arg0, %c1_i32 : i32
    %1 = arith.addi %0, %arg1 : i32
    %c0_i32 = arith.constant 0 : i32
    %c0_i32_0 = arith.constant 0 : i32
    return %1, %c0_i32 : i32, i32
  }
  func.func @transform_2(%arg0: i32, %arg1: i32) -> (i32, i32, i32) {
    %c0_i32 = arith.constant 0 : i32
    %c0_i32_0 = arith.constant 0 : i32
    %c0_i32_1 = arith.constant 0 : i32
    return %arg0, %c0_i32, %c0_i32_0 : i32, i32, i32
  }
}

</mosaic_0001>

<llo_original>
// kernel: tpu_custom_call.1
$region0: #{tpu_custom_call.1}
  #allocation0 [shape = 'u32[]', space=smem, size = 0x4, offset = 0x4, fixed_abs, tag = 'smem constant byte address 0x4 - core index']
  #allocation1 [shape = 'u32[144,128]{1,0:T(1,128)}', space=vmem, size = 0x12000, scoped, tag = 'internal scratch']
  #allocation2 [shape = 'f32[8,1]{1,0:T(8,128)}', space=vmem, size = 0x1000, scoped, tag = 'scratch operand']
  %s0 = inlined_call_operand.hbm [shape: f32[16,64], index: 0, kind: input, shape index: {}]
  %s1 = inlined_call_operand.hbm [shape: f32[16,64], index: 1, kind: input, shape index: {}]
  %s2 = inlined_call_operand.vmem [shape: f32[2,1,1], index: 2, kind: output, shape index: {}]
  %s3 = sld [smem:[#allocation0]]
  $region57: #{tpu_custom_call.1} parent=0
    _
  %s5 = ssub.s32 1, %s3
  %s6 = scalar_select 0, %s5, %s3
  $region1: #{tpu_custom_call.1} parent=0
    #allocation3 [shape = 'u8[8192]{0}', space=vmem, size = 0x2000, scoped, tag = 'input window, operand 0']
    #allocation4 [shape = 's32[2]{0}', space=sflag, size = 0x8, scoped, tag = 'scoped memory for tpu_custom_call.1']
    #allocation5 [shape = 'u8[8192]{0}', space=vmem, size = 0x2000, scoped, tag = 'input window, operand 1']
    #allocation6 [shape = 's32[2]{0}', space=sflag, size = 0x8, scoped, tag = 'scoped memory for tpu_custom_call.1']
    %7 = vsyncpa [#allocation4], 0
    %s8 = scalar_lea.sflag [#allocation4], 1
    %9 = vsyncpa %s8, 0
    %10 = vsyncpa [#allocation6], 0
    %s11 = scalar_lea.sflag [#allocation6], 1
    %12 = vsyncpa %s11, 0
    loop: start=0, step=1, limit=4
    $region2: #{tpu_custom_call.1} parent=1 // loop_pre_header
      _
    $region3: #{tpu_custom_call.1} parent=1 // loop_header
      %s14 = sphi 0, %s18
      %p15 = scmp.ge.s32.totalorder %s14, 4
      %s21 = sphi 0, %s33
      %s22 = sphi 0, %s29
      %s23 = sphi 0, %s21
      %s24 = sphi 0, %s22
      %s25 = sphi 0, %s23
      %s26 = sphi 0, %s24
      %s38 = sphi 0, %s40
      %s41 = sphi 0, %s38
      %s42 = sphi 0, %s41
      %s58 = sphi 0, %s42
      %s66 = sphi 0, %s68
      %s69 = sphi 0, %s66
      %s70 = sphi 0, %s69
      %s86 = sphi 0, %s70
      %s92 = sphi 0, %s94
      %s95 = sphi 0, %s92
      %s96 = sphi 0, %s95
      %s112 = sphi 0, %s96
    $region4: #{tpu_custom_call.1} parent=1 // loop_header_branch
      %17 = sbr.rel (%p15) target = $region8
    $region5: #{tpu_custom_call.1} parent=1 // loop_body
      %s19 = ssub.s32 %s14, 1
      %s20 = ssub.s32 %s14, 2
      %s27 = sadd.s32 1, %s22
      %p28 = scmp.ge.s32.totalorder %s27, 1
      %s29 = scalar_select %p28, 0, %s27
      %s30 = sadd.s32 1, %s21
      %s31 = scalar_select %p28, %s30, %s21
      %p32 = scmp.ge.s32.totalorder %s31, 2
      %s33 = scalar_select %p32, 0, %s31
      %s34 = sadd.s32 %s21, %s22
      %s35 = sadd.s32 %s33, %s29
      %s36 = ssub.s32 %s34, %s35
      %p37 = scmp.eq.s32.totalorder %s36, 0
      %s39 = sadd.s32 %s38, 1
      %s40 = scalar_select %p37, %s38, %s39
      %p43 = pneg %p37
      %p44 = scmp.eq.s32.totalorder %s14, 1
      %p45 = por %p43, %p44
      %p46 = scmp.ne.s32.totalorder %s38, %s41
      %p47 = scmp.eq.s32.totalorder %s14, 0
      %p48 = por %p46, %p47
      %p49 = scmp.ne.s32.totalorder %s38, %s41
      %p50 = scmp.eq.s32.totalorder %s19, 1
      %p51 = por %p49, %p50
      %p52 = scmp.ne.s32.totalorder %s41, %s42
      %p53 = scmp.eq.s32.totalorder %s19, 0
      %p54 = por %p52, %p53
      %p55 = scmp.ne.s32.totalorder %s41, %s42
      %p56 = scmp.eq.s32.totalorder %s20, 1
      %p57 = por %p55, %p56
      %p59 = scmp.ne.s32.totalorder %s42, %s58
      %p60 = scmp.eq.s32.totalorder %s20, 0
      %p61 = por %p59, %p60
      %s62 = sadd.s32 %s21, %s22
      %s63 = sadd.s32 %s33, %s29
      %s64 = ssub.s32 %s62, %s63
      %p65 = scmp.eq.s32.totalorder %s64, 0
      %s67 = sadd.s32 %s66, 1
      %s68 = scalar_select %p65, %s66, %s67
      %p71 = pneg %p65
      %p72 = scmp.eq.s32.totalorder %s14, 1
      %p73 = por %p71, %p72
      %p74 = scmp.ne.s32.totalorder %s66, %s69
      %p75 = scmp.eq.s32.totalorder %s14, 0
      %p76 = por %p74, %p75
      %p77 = scmp.ne.s32.totalorder %s66, %s69
      %p78 = scmp.eq.s32.totalorder %s19, 1
      %p79 = por %p77, %p78
      %p80 = scmp.ne.s32.totalorder %s69, %s70
      %p81 = scmp.eq.s32.totalorder %s19, 0
      %p82 = por %p80, %p81
      %p83 = scmp.ne.s32.totalorder %s69, %s70
      %p84 = scmp.eq.s32.totalorder %s20, 1
      %p85 = por %p83, %p84
      %p87 = scmp.ne.s32.totalorder %s70, %s86
      %p88 = scmp.eq.s32.totalorder %s20, 0
      %p89 = por %p87, %p88
      %s90 = ssub.s32 %s21, %s33
      %p91 = scmp.eq.s32.totalorder %s90, 0
      %s93 = sadd.s32 %s92, 1
      %s94 = scalar_select %p91, %s92, %s93
      %p97 = pneg %p91
      %p98 = scmp.eq.s32.totalorder %s14, 1
      %p99 = por %p97, %p98
      %p100 = scmp.ne.s32.totalorder %s92, %s95
      %p101 = scmp.eq.s32.totalorder %s14, 0
      %p102 = por %p100, %p101
      %p103 = scmp.ne.s32.totalorder %s92, %s95
      %p104 = scmp.eq.s32.totalorder %s19, 1
      %p105 = por %p103, %p104
      %p106 = scmp.ne.s32.totalorder %s95, %s96
      %p107 = scmp.eq.s32.totalorder %s19, 0
      %p108 = por %p106, %p107
      %p109 = scmp.ne.s32.totalorder %s95, %s96
      %p110 = scmp.eq.s32.totalorder %s20, 1
      %p111 = por %p109, %p110
      %p113 = scmp.ne.s32.totalorder %s96, %s112
      %p114 = scmp.eq.s32.totalorder %s20, 0
      %p115 = por %p113, %p114
      %p116 = scmp.le.s32.totalorder 1, %s14
      %p117 = scmp.lt.s32.totalorder %s14, 3
      %p118 = pnand %p116, %p117
      %p119 = pneg %p118
      // Predicated region
      $region9: #{tpu_custom_call.1} parent=5 // pred_check
        _
      $region10: #{tpu_custom_call.1} parent=5 // pred_check_branch
        %121 = sbr.rel (%p118) target = $region12
      $region11: #{tpu_custom_call.1} parent=5 // pred_region
        %s122 = ssub.s32 %s14, 1
      $region12: #{tpu_custom_call.1} parent=5 // pred_fallthru
        _
      %p123 = scmp.lt.s32.totalorder %s14, 2
      // Predicated region
      $region13: #{tpu_custom_call.1} parent=5 // pred_check
        %p124 = pneg %p123
      $region14: #{tpu_custom_call.1} parent=5 // pred_check_branch
        %126 = sbr.rel (%p124) target = $region16
      $region15: #{tpu_custom_call.1} parent=5 // pred_region
        // Predicated region
        $region17: #{tpu_custom_call.1} parent=15 // pred_check
          %p127 = pneg %p48
        $region18: #{tpu_custom_call.1} parent=15 // pred_check_branch
          %129 = sbr.rel (%p127) target = $region20
        $region19: #{tpu_custom_call.1} parent=15 // pred_region
          %s130 = sand.u32 %s38, 1
          %s131 = scalar_lea.sflag [#allocation4], %s130
          %s132 = sand.u32 %s38, 1
          %s133 = smul.addr %s132, 8
          %s134 = scalar_lea.vmem [#allocation3], %s133
          %s135 = sadd.s32 %s21, %s22
          %s137 = ssub.s32 128, 128
          %138 = vsyncadd %s131, %s137
          %s139 = smul.addr %s135, 128
          %s140 = scalar_lea.hbm %s0, %s139
          %s142 = sshll.u32 %s134, 4
          %s143 = int_to_ptr.vmem [resolvable:$true] %s142
          %145 = dma.hbm_to_vmem [thread:$0]  %s140, 128, %s143, %s131
        $region20: #{tpu_custom_call.1} parent=15 // pred_fallthru
          _
        // Predicated region
        $region21: #{tpu_custom_call.1} parent=15 // pred_check
          %p146 = pneg %p76
        $region22: #{tpu_custom_call.1} parent=15 // pred_check_branch
          %148 = sbr.rel (%p146) target = $region24
        $region23: #{tpu_custom_call.1} parent=15 // pred_region
          %s149 = sand.u32 %s66, 1
          %s150 = scalar_lea.sflag [#allocation6], %s149
          %s151 = sand.u32 %s66, 1
          %s152 = smul.addr %s151, 8
          %s153 = scalar_lea.vmem [#allocation5], %s152
          %s154 = sadd.s32 %s21, %s22
          %s156 = ssub.s32 128, 128
          %157 = vsyncadd %s150, %s156
          %s158 = smul.addr %s154, 128
          %s159 = scalar_lea.hbm %s1, %s158
          %s161 = sshll.u32 %s153, 4
          %s162 = int_to_ptr.vmem [resolvable:$true] %s161
          %164 = dma.hbm_to_vmem [thread:$0]  %s159, 128, %s162, %s150
        $region24: #{tpu_custom_call.1} parent=15 // pred_fallthru
          _
      $region16: #{tpu_custom_call.1} parent=5 // pred_fallthru
        _
      %p165 = scmp.le.s32.totalorder 1, %s14
      %p166 = scmp.lt.s32.totalorder %s14, 3
      %p167 = pnand %p165, %p166
      %p168 = pneg %p167
      // Predicated region
      $region25: #{tpu_custom_call.1} parent=5 // pred_check
        _
      $region26: #{tpu_custom_call.1} parent=5 // pred_check_branch
        %170 = sbr.rel (%p167) target = $region28
      $region27: #{tpu_custom_call.1} parent=5 // pred_region
        %s171 = ssub.s32 %s14, 1
        %s172 = sand.u32 %s41, 1
        %s173 = scalar_lea.sflag [#allocation4], %s172
        %s174 = sand.u32 %s41, 1
        %s175 = smul.addr %s174, 8
        %s176 = scalar_lea.vmem [#allocation3], %s175
        // Predicated region
        $region29: #{tpu_custom_call.1} parent=27 // pred_check
          %p177 = pneg %p54
        $region30: #{tpu_custom_call.1} parent=27 // pred_check_branch
          %179 = sbr.rel (%p177) target = $region32
        $region31: #{tpu_custom_call.1} parent=27 // pred_region
          %180 = dma.done %s173, 128
        $region32: #{tpu_custom_call.1} parent=27 // pred_fallthru
          _
        %s181 = sand.u32 %s69, 1
        %s182 = scalar_lea.sflag [#allocation6], %s181
        %s183 = sand.u32 %s69, 1
        %s184 = smul.addr %s183, 8
        %s185 = scalar_lea.vmem [#allocation5], %s184
        // Predicated region
        $region33: #{tpu_custom_call.1} parent=27 // pred_check
          %p186 = pneg %p82
        $region34: #{tpu_custom_call.1} parent=27 // pred_check_branch
          %188 = sbr.rel (%p186) target = $region36
        $region35: #{tpu_custom_call.1} parent=27 // pred_region
          %189 = dma.done %s182, 128
        $region36: #{tpu_custom_call.1} parent=27 // pred_fallthru
          _
        %s190 = sand.u32 %s41, 1
        %s191 = scalar_lea.sflag [#allocation4], %s190
        %s192 = sand.u32 %s41, 1
        %s193 = smul.addr %s192, 8
        %s194 = scalar_lea.vmem [#allocation3], %s193
        %p195 = pneg %p54
        %p196 = pneg %p51
        %s197 = sand.u32 %s69, 1
        %s198 = scalar_lea.sflag [#allocation6], %s197
        %s199 = sand.u32 %s69, 1
        %s200 = smul.addr %s199, 8
        %s201 = scalar_lea.vmem [#allocation5], %s200
        %p202 = pneg %p82
        %p203 = pneg %p79
        %p204 = pneg %p108
        %p205 = pneg %p105
        %p206 = scmp.lt.s32.totalorder %s23, 1
        %s207 = scalar_select %p206, %s23, 1
        %s208 = scalar_lea.vmem %s2, %s207
        %s209 = sadd.s32 %s23, %s24
        %s210 = sadd.s32 %s23, %s24
        %p211 = scmp.lt.s32.totalorder %s23, 1
        %s212 = scalar_select %p211, %s23, 1
        %s213 = scalar_lea.vmem %s2, %s212
        %p214 = scmp.eq.s32.totalorder %s24, 0
        // Predicated region
        $region37: #{tpu_custom_call.1} parent=27 // pred_check
          %p215 = pneg %p214
        $region38: #{tpu_custom_call.1} parent=27 // pred_check_branch
          %217 = sbr.rel (%p215) target = $region40
        $region39: #{tpu_custom_call.1} parent=27 // pred_region
          %vm218 = vcmask 7168
          %219 = vst.msk [vmem:[#allocation2] sm:$0xff] %vm218, 0.0
        $region40: #{tpu_custom_call.1} parent=27 // pred_fallthru
          _
        %v220 = vld [vmem:[%s176] sm:$0xff]
        %v221 = vld [vmem:[%s185] sm:$0xff]
        %v222 = vsub.f32 %v220, %v221
        %v223 = vmul.f32 %v222, %v222
        %vm224 = vcmask 523264
        %v225 = vsel %vm224, %v223, 0.0
        %226 = vadd.xlane.f32.xlu0 %v225
        %v227 = vpop.xlane.xlu0 %226
        %v228 = vld [vmem:[#allocation2] sm:$0xff]
        %v229 = vrsqrt.pop %v227
        %v230 = vmul.f32 %v227, %v229
        %vm231 = vcmp.eq.f32.partialorder %v227, inf
        %v232 = vsel %vm231, %v227, %v230
        %vm233 = vcmp.eq.f32.partialorder %v227, 0.0
        %v234 = vand.u32 %v227, 2147483648
        %v235 = vsel %vm233, %v234, %v232
        %v236 = vadd.f32 %v228, %v235
        %vm237 = vcmask 7168
        %238 = vst.msk [vmem:[#allocation2] sm:$0xff] %vm237, %v236
        // Predicated region
        $region41: #{tpu_custom_call.1} parent=27 // pred_check
          %p239 = pneg %p214
        $region42: #{tpu_custom_call.1} parent=27 // pred_check_branch
          %241 = sbr.rel (%p239) target = $region44
        $region43: #{tpu_custom_call.1} parent=27 // pred_region
          %v242 = vld [vmem:[#allocation2] sm:$0xff]
          %v243 = vsel %vm237, %v242, 0.0
          %244 = vadd.xlane.f32.xlu0 %v243
          %v245 = vpop.xlane.xlu0 %244
          %v246 = vrot.slane %v245, 4
          %v247 = vadd.f32 %v245, %v246
          %v248 = vrot.slane %v247, 2
          %v249 = vadd.f32 %v247, %v248
          %v250 = vrot.slane %v249, 1
          %v251 = vadd.f32 %v249, %v250
          %s252 = vtos %v251
          %v253 = vstv %s252
          %vm254 = vcmask 0
          %255 = vst.msk [vmem:[%s213] sm:$0x1] %vm254, %v253
        $region44: #{tpu_custom_call.1} parent=27 // pred_fallthru
          _
        %p256 = scmp.lt.s32.totalorder %s23, 1
        %s257 = scalar_select %p256, %s23, 1
        %s258 = scalar_lea.vmem %s2, %s257
        // Predicated region
        $region45: #{tpu_custom_call.1} parent=27 // pred_check
          %p259 = pneg %p105
        $region46: #{tpu_custom_call.1} parent=27 // pred_check_branch
          %261 = sbr.rel (%p259) target = $region48
        $region47: #{tpu_custom_call.1} parent=27 // pred_region
          _
        $region48: #{tpu_custom_call.1} parent=27 // pred_fallthru
          _
      $region28: #{tpu_custom_call.1} parent=5 // pred_fallthru
        _
      %p262 = scmp.le.s32.totalorder 2, %s14
      // Predicated region
      $region49: #{tpu_custom_call.1} parent=5 // pred_check
        %p263 = pneg %p262
      $region50: #{tpu_custom_call.1} parent=5 // pred_check_branch
        %265 = sbr.rel (%p263) target = $region52
      $region51: #{tpu_custom_call.1} parent=5 // pred_region
        %s266 = ssub.s32 %s14, 2
        // Predicated region
        $region53: #{tpu_custom_call.1} parent=51 // pred_check
          %p267 = pneg %p111
        $region54: #{tpu_custom_call.1} parent=51 // pred_check_branch
          %269 = sbr.rel (%p267) target = $region56
        $region55: #{tpu_custom_call.1} parent=51 // pred_region
          %p270 = scmp.lt.s32.totalorder %s25, 1
          %s271 = scalar_select %p270, %s25, 1
          %s272 = scalar_lea.vmem %s2, %s271
        $region56: #{tpu_custom_call.1} parent=51 // pred_fallthru
          _
      $region52: #{tpu_custom_call.1} parent=5 // pred_fallthru
        _
    $region6: #{tpu_custom_call.1} parent=1 // loop_footer
      %s18 = sadd.s32 1, %s14
    $region7: #{tpu_custom_call.1} parent=1 // loop_footer_branch
      %13 = sbr.rel target = $region3
    $region8: #{tpu_custom_call.1} parent=1 // loop_exit
      _
    %273 = vsyncpa [#allocation4], 1
    %s274 = scalar_lea.sflag [#allocation4], 1
    %275 = vsyncpa %s274, 1
    %276 = vsyncpa [#allocation6], 1
    %s277 = scalar_lea.sflag [#allocation6], 1
    %278 = vsyncpa %s277, 1

</llo_original>
